<compile_context>
chip_gen: v7x
topology: tpu7x:2x2x1
jax: 0.10.0
libtpu: 0.0.40
codegen_flags: <defaults>
</compile_context>

<pallas_src>
import functools

import jax
import jax.numpy as jnp
from jax import lax
from jax.experimental import pallas as pl
from jax.experimental.pallas import tpu as pltpu

BN_EPS = 1e-5

# (Cin, Cout, has_bn_relu) for the 5 convs in features[0:15]
LAYERS = [(3, 64, True), (64, 64, True), (64, 128, True), (128, 128, True), (128, 256, False)]
POOL_AFTER = (1, 3)   # 2x2 max-pool follows conv index 1 and 3
TH_CAP = 8            # rows per strip (kept small so the 16x16 smoke test exercises >1 strip)


def _round_up(x, m):
    return (x + m - 1) // m * m


def _pick_th(h, pool):
    """Largest divisor of h that is <= TH_CAP (and even when the 2x2 pool is fused)."""
    best = 2 if pool else 1
    for d in range(1, min(h, TH_CAP) + 1):
        if h % d == 0 and (not pool or d % 2 == 0):
            best = d
    return best


# ----------------------------------------------------------------------------
# Kernel A: fused 3x3 conv (pad=1) + folded-BN affine (+ReLU) (+2x2 maxpool)
# ----------------------------------------------------------------------------
def _conv3x3_kernel(xs_ref, w_ref, scale_ref, bias_ref, o_ref, *scratch,
                    TH, W, Wp, Cin, Cout, relu, pool):
    # xs_ref : (1, TH+2, Wp, Cin) bf16  zero-padded input row strip (2-row halo, Wp >= W+2)
    # w_ref  : (3*Cin, 3*Cout)    bf16  weights packed as [dy*Cin + c, dx*Cout + o]
    # scale_ref / bias_ref : (1, Cout) f32 folded BN affine
    # o_ref  : (1, TH, W, Cout) or (1, TH//2, W//2, Cout) when pool
    x = xs_ref[0]                                                        # (TH+2, Wp, Cin)

    # Fold the 3 dy taps into the K dimension: leading-axis slices + lane concat only.
    col = jnp.concatenate([x[0:TH], x[1:TH + 1], x[2:TH + 2]], axis=-1)  # (TH, Wp, 3Cin)

    # Single MXU matmul: K = 3*Cin, N = 3*Cout (all three dx taps at once), f32 acc.
    y = jnp.dot(col.reshape(TH * Wp, 3 * Cin), w_ref[...],
                preferred_element_type=jnp.float32)                      # (TH*Wp, 3Cout)
    y = y.reshape(TH, Wp, 3 * Cout)

    # Apply the 3 dx taps as shifted adds on the f32 result; drop padded columns.
    y = (y[:, 0:W, 0:Cout]
         + y[:, 1:W + 1, Cout:2 * Cout]
         + y[:, 2:W + 2, 2 * Cout:3 * Cout])                             # (TH, W, Cout)

    # Folded BatchNorm affine (+ReLU) epilogue in f32 (VPU work rides under the MXU).
    y = y * scale_ref[...] + bias_ref[...]
    if relu:
        y = jnp.maximum(y, 0.0)

    if pool:
        # Fused 2x2 / stride-2 max-pool.
        # Rows: split the (untiled) leading axis and take the pairwise max.
        y2 = y.reshape(TH // 2, 2, W, Cout)
        yh = jnp.maximum(y2[:, 0], y2[:, 1])                             # (TH//2, W, Cout)
        # Columns: strided reads (stride 2 along the sublane axis) from a VMEM scratch.
        pbuf = scratch[0]                                                # (TH//2, W, Cout) f32
        pbuf[...] = yh
        y = jnp.maximum(pbuf[:, pl.ds(0, W // 2, 2), :],
                        pbuf[:, pl.ds(1, W // 2, 2), :])                 # (TH//2, W//2, Cout)

    o_ref[0] = y.astype(o_ref.dtype)


def conv3x3_fused(x, w_packed, scale, bias, *, relu, pool, out_dtype):
    """x: (N, H, W, Cin) bf16 activations.  w_packed: (3*Cin, 3*Cout) bf16."""
    N, H, W, Cin = x.shape
    Cout = w_packed.shape[1] // 3
    TH = _pick_th(H, pool)
    S = H // TH
    Wp = _round_up(W + 2, 8)   # padded width; multiple of 8 keeps in-kernel reshapes layout-trivial

    # Zero-padded, halo-overlapped row strips: (N*S, TH+2, Wp, Cin).  (XLA glue; this
    # replaces the previous jnp.pad round trip and makes BlockSpec pipelining trivial.)
    xp = jnp.pad(x, ((0, 0), (1, 1), (1, Wp - W - 1), (0, 0)))
    strips = jnp.stack([lax.slice_in_dim(xp, s * TH, s * TH + TH + 2, axis=1)
                        for s in range(S)], axis=1)
    xs = strips.reshape(N * S, TH + 2, Wp, Cin)

    Ho, Wo = (H // 2, W // 2) if pool else (H, W)
    THo = TH // 2 if pool else TH

    kernel = functools.partial(_conv3x3_kernel, TH=TH, W=W, Wp=Wp,
                               Cin=Cin, Cout=Cout, relu=relu, pool=pool)

    out_bytes = N * Ho * Wo * Cout * jnp.dtype(out_dtype).itemsize
    cost = pl.CostEstimate(
        flops=2 * N * H * W * 9 * Cin * Cout,
        transcendentals=0,
        bytes_accessed=xs.size * 2 + w_packed.size * 2 + 2 * Cout * 4 + out_bytes)

    return pl.pallas_call(
        kernel,
        out_shape=jax.ShapeDtypeStruct((N, Ho, Wo, Cout), out_dtype),
        grid=(N, S),
        in_specs=[
            pl.BlockSpec((1, TH + 2, Wp, Cin), lambda n, s: (n * S + s, 0, 0, 0)),
            pl.BlockSpec((3 * Cin, 3 * Cout), lambda n, s: (0, 0)),
            pl.BlockSpec((1, Cout), lambda n, s: (0, 0)),
            pl.BlockSpec((1, Cout), lambda n, s: (0, 0)),
        ],
        out_specs=pl.BlockSpec((1, THo, Wo, Cout), lambda n, s: (n, s, 0, 0)),
        scratch_shapes=([pltpu.VMEM((TH // 2, W, Cout), jnp.float32)] if pool else []),
        compiler_params=pltpu.CompilerParams(
            dimension_semantics=("parallel", "parallel"),
            vmem_limit_bytes=32 * 1024 * 1024),
        cost_estimate=cost,
    )(xs, w_packed, scale.reshape(1, Cout), bias.reshape(1, Cout))


# ----------------------------------------------------------------------------
# Kernel B: layer 0 (Cin=3) -> wrapper-side im2col to K=27 + fused matmul/BN/ReLU
# ----------------------------------------------------------------------------
def _mm_bn_relu_kernel(x_ref, w_ref, scale_ref, bias_ref, o_ref):
    y = jnp.dot(x_ref[...], w_ref[...], preferred_element_type=jnp.float32)
    y = jnp.maximum(y * scale_ref[...] + bias_ref[...], 0.0)
    o_ref[...] = y.astype(o_ref.dtype)


def conv0_im2col(x, w_packed, scale, bias):
    N, H, W, Cin = x.shape            # Cin = 3
    Cout = w_packed.shape[1]
    xp = jnp.pad(x, ((0, 0), (1, 1), (1, 1), (0, 0)))
    cols = jnp.concatenate([xp[:, dy:dy + H, dx:dx + W, :]
                            for dy in range(3) for dx in range(3)], axis=-1)
    R, K = N * H * W, 9 * Cin
    xm = cols.reshape(R, K).astype(jnp.bfloat16)
    TR = 256 if R % 256 == 0 else R

    cost = pl.CostEstimate(flops=2 * R * K * Cout, transcendentals=0,
                           bytes_accessed=R * K * 2 + K * Cout * 2 + 2 * Cout * 4 + R * Cout * 2)
    out = pl.pallas_call(
        _mm_bn_relu_kernel,
        out_shape=jax.ShapeDtypeStruct((R, Cout), jnp.bfloat16),
        grid=(R // TR,),
        in_specs=[
            pl.BlockSpec((TR, K), lambda r: (r, 0)),
            pl.BlockSpec((K, Cout), lambda r: (0, 0)),
            pl.BlockSpec((1, Cout), lambda r: (0, 0)),
            pl.BlockSpec((1, Cout), lambda r: (0, 0)),
        ],
        out_specs=pl.BlockSpec((TR, Cout), lambda r: (r, 0)),
        compiler_params=pltpu.CompilerParams(
            dimension_semantics=("parallel",),
            vmem_limit_bytes=32 * 1024 * 1024),
        cost_estimate=cost,
    )(xm, w_packed, scale.reshape(1, Cout), bias.reshape(1, Cout))
    return out.reshape(N, H, W, Cout)


# ----------------------------------------------------------------------------
# Parameters (deterministic synthetic weights) + BN folding / weight packing
# ----------------------------------------------------------------------------
def make_params(key):
    raw = []
    for (cin, cout, has_bn) in LAYERS:
        key, kw, kb, kg, kbe, km, kv = jax.random.split(key, 7)
        std = (2.0 / (9.0 * cin)) ** 0.5
        layer = {
            "w": jax.random.normal(kw, (3, 3, cin, cout), jnp.float32) * std,
            "b": jax.random.normal(kb, (cout,), jnp.float32) * 0.05,
        }
        if has_bn:
            layer.update({
                "gamma": jax.random.uniform(kg, (cout,), jnp.float32, 0.5, 1.5),
                "beta": jax.random.normal(kbe, (cout,), jnp.float32) * 0.05,
                "mean": jax.random.normal(km, (cout,), jnp.float32) * 0.05,
                "var": jax.random.uniform(kv, (cout,), jnp.float32, 0.5, 1.5),
            })
        raw.append(layer)
    return raw


def fold_bn(raw):
    """Fold conv bias + eval-mode BN into per-channel (scale, bias); pack/cast weights."""
    folded = []
    for idx, (layer, (cin, cout, has_bn)) in enumerate(zip(raw, LAYERS)):
        if has_bn:
            scale = layer["gamma"] / jnp.sqrt(layer["var"] + BN_EPS)
            bias = (layer["b"] - layer["mean"]) * scale + layer["beta"]
        else:
            scale = jnp.ones((cout,), jnp.float32)
            bias = layer["b"]
        w = layer["w"]                                       # (3, 3, Cin, Cout) HWIO
        if idx == 0:
            w_packed = w.reshape(9 * cin, cout)              # matches wrapper im2col order (dy, dx, c)
        else:
            # [dy*Cin + c, dx*Cout + o] packing for the big-K / wide-N conv kernel
            w_packed = jnp.transpose(w, (0, 2, 1, 3)).reshape(3 * cin, 3 * cout)
        folded.append((w_packed.astype(jnp.bfloat16), scale, bias))
    return folded


# ----------------------------------------------------------------------------
# Full forward (Pallas path) and references
# ----------------------------------------------------------------------------
def vgg_bn_feature_pallas(x_nchw, folded):
    x = jnp.transpose(x_nchw, (0, 2, 3, 1))                      # NCHW -> NHWC
    x = conv0_im2col(x, *folded[0])                              # (N, H, W, 64) bf16
    for i in range(1, len(LAYERS)):
        w, scale, bias = folded[i]
        last = (i == len(LAYERS) - 1)
        x = conv3x3_fused(x, w, scale, bias,
                          relu=LAYERS[i][2],
                          pool=(i in POOL_AFTER),
                          out_dtype=jnp.float32 if last else jnp.bfloat16)
    return jnp.transpose(x, (0, 3, 1, 2))                        # NHWC -> NCHW


def maxpool2(x_nhwc):
    n, h, w, c = x_nhwc.shape
    return x_nhwc.reshape(n, h // 2, 2, w // 2, 2, c).max(axis=(2, 4))


def vgg_bn_feature_ref_f32(x_nchw, raw):
    """Exact f32 semantics of the PyTorch module."""
    x = jnp.transpose(x_nchw, (0, 2, 3, 1))
    for i, (layer, (_, _, has_bn)) in enumerate(zip(raw, LAYERS)):
        x = lax.conv_general_dilated(
            x, layer["w"], window_strides=(1, 1), padding="SAME",
            dimension_numbers=("NHWC", "HWIO", "NHWC")) + layer["b"]
        if has_bn:
            x = (x - layer["mean"]) / jnp.sqrt(layer["var"] + BN_EPS) * layer["gamma"] + layer["beta"]
            x = jnp.maximum(x, 0.0)
        if i in POOL_AFTER:
            x = maxpool2(x)
    return jnp.transpose(x, (0, 3, 1, 2))


def vgg_bn_feature_ref_bf16(x_nchw, raw):
    """Reference mirroring the kernel's numerics (bf16 operands, f32 acc, bf16 activations)."""
    x = jnp.transpose(x_nchw, (0, 2, 3, 1))
    for i, (layer, (_, _, has_bn)) in enumerate(zip(raw, LAYERS)):
        if has_bn:
            scale = layer["gamma"] / jnp.sqrt(layer["var"] + BN_EPS)
            bias = (layer["b"] - layer["mean"]) * scale + layer["beta"]
        else:
            scale = jnp.ones_like(layer["b"])
            bias = layer["b"]
        y = lax.conv_general_dilated(
            x.astype(jnp.bfloat16), layer["w"].astype(jnp.bfloat16),
            window_strides=(1, 1), padding="SAME",
            dimension_numbers=("NHWC", "HWIO", "NHWC"),
            preferred_element_type=jnp.float32)
        y = y * scale + bias
        if has_bn:
            y = jnp.maximum(y, 0.0)
        if i in POOL_AFTER:
            y = maxpool2(y)
        x = y.astype(jnp.float32 if i == len(LAYERS) - 1 else jnp.bfloat16)
    return jnp.transpose(x, (0, 3, 1, 2))


if __name__ == "__main__":
    key = jax.random.PRNGKey(0)
    kx, kp = jax.random.split(key)

    # Small NCHW input consistent with the module (RGB image batch)
    x = jax.random.normal(kx, (2, 3, 16, 16), jnp.float32)

    raw_params = make_params(kp)
    folded_params = fold_bn(raw_params)

    out = jax.block_until_ready(vgg_bn_feature_pallas(x, folded_params))
    assert out.shape == (2, 256, 4, 4), out.shape

    # Tight check against a reference with matching numerics (bf16 operands, f32 accumulation).
    ref_b = jax.block_until_ready(vgg_bn_feature_ref_bf16(x, raw_params))
    max_err = float(jnp.abs(out - ref_b).max())
    assert jnp.allclose(out, ref_b, atol=1e-2, rtol=1e-2), max_err

    # Loose sanity check against the exact f32 module semantics (bf16 rounding allowance).
    ref_f = jax.block_until_ready(vgg_bn_feature_ref_f32(x, raw_params))
    rel = float(jnp.linalg.norm(out - ref_f) / jnp.linalg.norm(ref_f))
    assert rel < 0.03, rel

    print("KERNEL_OK")
</pallas_src>

<mosaic_0001>
module attributes {stable_mosaic.version = 11 : i64} {
  func.func @_mm_bn_relu_kernel(%arg0: i32, %arg1: memref<256x27xbf16, #tpu.memory_space<vmem>>, %arg2: memref<27x64xbf16, #tpu.memory_space<vmem>>, %arg3: memref<1x64xf32, #tpu.memory_space<vmem>>, %arg4: memref<1x64xf32, #tpu.memory_space<vmem>>, %arg5: memref<256x64xbf16, #tpu.memory_space<vmem>>) attributes {dimension_semantics = [#tpu.dimension_semantics<parallel>], iteration_bounds = array<i64: 2>, scalar_prefetch = 0 : i64, scratch_operands = 0 : i64, tpu.core_type = #tpu.core_type<tc>, window_params = [{transform_indices = @transform_0, window_bounds = array<i64: 256, 27>}, {pipeline_mode = #tpu.pipeline_mode<synchronous>, transform_indices = @transform_1, window_bounds = array<i64: 27, 64>}, {pipeline_mode = #tpu.pipeline_mode<synchronous>, transform_indices = @transform_2, window_bounds = array<i64: 1, 64>}, {pipeline_mode = #tpu.pipeline_mode<synchronous>, transform_indices = @transform_3, window_bounds = array<i64: 1, 64>}, {transform_indices = @transform_4, window_bounds = array<i64: 256, 64>}]} {
    %c0 = arith.constant 0 : index
    %c0_0 = arith.constant 0 : index
    %0 = vector.load %arg1[%c0, %c0_0] : memref<256x27xbf16, #tpu.memory_space<vmem>>, vector<256x27xbf16>
    %c0_1 = arith.constant 0 : index
    %c0_2 = arith.constant 0 : index
    %1 = vector.load %arg2[%c0_1, %c0_2] : memref<27x64xbf16, #tpu.memory_space<vmem>>, vector<27x64xbf16>
    %cst = arith.constant dense<0.000000e+00> : vector<256x64xf32>
    %2 = tpu.matmul %0, %1, %cst {dimension_numbers = #tpu.dot_dimension_numbers<[1], [0], [0], [1], [0, 0, 1, 1], [], []>} : vector<256x27xbf16>, vector<27x64xbf16>, vector<256x64xf32> -> vector<256x64xf32>
    %c0_3 = arith.constant 0 : index
    %c0_4 = arith.constant 0 : index
    %3 = vector.load %arg3[%c0_3, %c0_4] : memref<1x64xf32, #tpu.memory_space<vmem>>, vector<1x64xf32>
    %4 = vector.broadcast %3 : vector<1x64xf32> to vector<256x64xf32>
    %5 = arith.mulf %2, %4 : vector<256x64xf32>
    %c0_5 = arith.constant 0 : index
    %c0_6 = arith.constant 0 : index
    %6 = vector.load %arg4[%c0_5, %c0_6] : memref<1x64xf32, #tpu.memory_space<vmem>>, vector<1x64xf32>
    %7 = vector.broadcast %6 : vector<1x64xf32> to vector<256x64xf32>
    %8 = arith.addf %5, %7 : vector<256x64xf32>
    %cst_7 = arith.constant 0.000000e+00 : f32
    %9 = vector.broadcast %cst_7 : f32 to vector<256x64xf32>
    %10 = arith.maximumf %8, %9 : vector<256x64xf32>
    %11 = arith.truncf %10 : vector<256x64xf32> to vector<256x64xbf16>
    %c0_8 = arith.constant 0 : index
    %c0_9 = arith.constant 0 : index
    %12 = vector.load %arg5[%c0_8, %c0_9] : memref<256x64xbf16, #tpu.memory_space<vmem>>, vector<256x64xbf16>
    tpu.vector_store %arg5[%c0_8, %c0_9], %11 {strides = array<i32>} : memref<256x64xbf16, #tpu.memory_space<vmem>>, vector<256x64xbf16>,
    return
  }
  func.func @transform_0(%arg0: i32) -> (i32, i32) {
    %c0_i32 = arith.constant 0 : i32
    %c0_i32_0 = arith.constant 0 : i32
    return %arg0, %c0_i32 : i32, i32
  }
  func.func @transform_1(%arg0: i32) -> (i32, i32) {
    %c0_i32 = arith.constant 0 : i32
    %c0_i32_0 = arith.constant 0 : i32
    %c0_i32_1 = arith.constant 0 : i32
    return %c0_i32, %c0_i32_0 : i32, i32
  }
  func.func @transform_2(%arg0: i32) -> (i32, i32) {
    %c0_i32 = arith.constant 0 : i32
    %c0_i32_0 = arith.constant 0 : i32
    %c0_i32_1 = arith.constant 0 : i32
    return %c0_i32, %c0_i32_0 : i32, i32
  }
  func.func @transform_3(%arg0: i32) -> (i32, i32) {
    %c0_i32 = arith.constant 0 : i32
    %c0_i32_0 = arith.constant 0 : i32
    %c0_i32_1 = arith.constant 0 : i32
    return %c0_i32, %c0_i32_0 : i32, i32
  }
  func.func @transform_4(%arg0: i32) -> (i32, i32) {
    %c0_i32 = arith.constant 0 : i32
    %c0_i32_0 = arith.constant 0 : i32
    return %arg0, %c0_i32 : i32, i32
  }
}

</mosaic_0001>

<llo_original>
// kernel: tpu_custom_call.1
$region0: #{tpu_custom_call.1}
  #allocation0 [shape = 'u32[]', space=smem, size = 0x4, offset = 0x4, fixed_abs, tag = 'smem constant byte address 0x4 - core index']
  #allocation1 [shape = 'u32[144,128]{1,0:T(1,128)}', space=vmem, size = 0x12000, scoped, tag = 'internal scratch']
  %s0 = inlined_call_operand.vmem [shape: bf16[512,27], index: 0, kind: input, shape index: {}]
  %s1 = inlined_call_operand.vmem [shape: bf16[27,64], index: 1, kind: input, shape index: {}]
  %s2 = inlined_call_operand.vmem [shape: f32[1,64], index: 2, kind: input, shape index: {}]
  %s3 = inlined_call_operand.vmem [shape: f32[1,64], index: 3, kind: input, shape index: {}]
  %s4 = inlined_call_operand.vmem [shape: bf16[512,64], index: 4, kind: output, shape index: {}]
  %s5 = sld [smem:[#allocation0]]
  $region49: #{tpu_custom_call.1} parent=0
    _
  %s7 = ssub.s32 1, %s5
  %s8 = scalar_select 0, %s7, %s5
  loop: start=0, step=1, limit=4
  $region2: #{tpu_custom_call.1} parent=0 // loop_pre_header
    _
  $region3: #{tpu_custom_call.1} parent=0 // loop_header
    %s10 = sphi 0, %s14
    %p11 = scmp.ge.s32.totalorder %s10, 4
    %s20 = sphi 0, %s22
    %s23 = sphi 0, %s20
    %s24 = sphi 0, %s23
    %s40 = sphi 0, %s24
    %s44 = sphi 0, %s44
    %s46 = sphi 0, %s44
    %s47 = sphi 0, %s46
    %s61 = sphi 0, %s47
    %s65 = sphi 0, %s65
    %s67 = sphi 0, %s65
    %s68 = sphi 0, %s67
    %s82 = sphi 0, %s68
    %s86 = sphi 0, %s86
    %s88 = sphi 0, %s86
    %s89 = sphi 0, %s88
    %s103 = sphi 0, %s89
    %s109 = sphi 0, %s111
    %s112 = sphi 0, %s109
    %s113 = sphi 0, %s112
    %s129 = sphi 0, %s113
  $region4: #{tpu_custom_call.1} parent=0 // loop_header_branch
    %13 = sbr.rel (%p11) target = $region8
  $region5: #{tpu_custom_call.1} parent=0 // loop_body
    %s15 = ssub.s32 %s10, 1
    %s16 = ssub.s32 %s10, 2
    %s17 = sadd.s32 %s10, 1
    %s18 = ssub.s32 %s10, %s17
    %p19 = scmp.eq.s32.totalorder %s18, 0
    %s21 = sadd.s32 %s20, 1
    %s22 = scalar_select %p19, %s20, %s21
    %p25 = pneg %p19
    %p26 = scmp.eq.s32.totalorder %s10, 1
    %p27 = por %p25, %p26
    %p28 = scmp.ne.s32.totalorder %s20, %s23
    %p29 = scmp.eq.s32.totalorder %s10, 0
    %p30 = por %p28, %p29
    %p31 = scmp.ne.s32.totalorder %s20, %s23
    %p32 = scmp.eq.s32.totalorder %s15, 1
    %p33 = por %p31, %p32
    %p34 = scmp.ne.s32.totalorder %s23, %s24
    %p35 = scmp.eq.s32.totalorder %s15, 0
    %p36 = por %p34, %p35
    %p37 = scmp.ne.s32.totalorder %s23, %s24
    %p38 = scmp.eq.s32.totalorder %s16, 1
    %p39 = por %p37, %p38
    %p41 = scmp.ne.s32.totalorder %s24, %s40
    %p42 = scmp.eq.s32.totalorder %s16, 0
    %p43 = por %p41, %p42
    %s45 = sadd.s32 %s44, 1
    %p48 = scmp.eq.s32.totalorder %s10, 1
    %p49 = scmp.ne.s32.totalorder %s44, %s46
    %p50 = scmp.eq.s32.totalorder %s10, 0
    %p51 = por %p49, %p50
    %p52 = scmp.ne.s32.totalorder %s44, %s46
    %p53 = scmp.eq.s32.totalorder %s15, 1
    %p54 = por %p52, %p53
    %p55 = scmp.ne.s32.totalorder %s46, %s47
    %p56 = scmp.eq.s32.totalorder %s15, 0
    %p57 = por %p55, %p56
    %p58 = scmp.ne.s32.totalorder %s46, %s47
    %p59 = scmp.eq.s32.totalorder %s16, 1
    %p60 = por %p58, %p59
    %p62 = scmp.ne.s32.totalorder %s47, %s61
    %p63 = scmp.eq.s32.totalorder %s16, 0
    %p64 = por %p62, %p63
    %s66 = sadd.s32 %s65, 1
    %p69 = scmp.eq.s32.totalorder %s10, 1
    %p70 = scmp.ne.s32.totalorder %s65, %s67
    %p71 = scmp.eq.s32.totalorder %s10, 0
    %p72 = por %p70, %p71
    %p73 = scmp.ne.s32.totalorder %s65, %s67
    %p74 = scmp.eq.s32.totalorder %s15, 1
    %p75 = por %p73, %p74
    %p76 = scmp.ne.s32.totalorder %s67, %s68
    %p77 = scmp.eq.s32.totalorder %s15, 0
    %p78 = por %p76, %p77
    %p79 = scmp.ne.s32.totalorder %s67, %s68
    %p80 = scmp.eq.s32.totalorder %s16, 1
    %p81 = por %p79, %p80
    %p83 = scmp.ne.s32.totalorder %s68, %s82
    %p84 = scmp.eq.s32.totalorder %s16, 0
    %p85 = por %p83, %p84
    %s87 = sadd.s32 %s86, 1
    %p90 = scmp.eq.s32.totalorder %s10, 1
    %p91 = scmp.ne.s32.totalorder %s86, %s88
    %p92 = scmp.eq.s32.totalorder %s10, 0
    %p93 = por %p91, %p92
    %p94 = scmp.ne.s32.totalorder %s86, %s88
    %p95 = scmp.eq.s32.totalorder %s15, 1
    %p96 = por %p94, %p95
    %p97 = scmp.ne.s32.totalorder %s88, %s89
    %p98 = scmp.eq.s32.totalorder %s15, 0
    %p99 = por %p97, %p98
    %p100 = scmp.ne.s32.totalorder %s88, %s89
    %p101 = scmp.eq.s32.totalorder %s16, 1
    %p102 = por %p100, %p101
    %p104 = scmp.ne.s32.totalorder %s89, %s103
    %p105 = scmp.eq.s32.totalorder %s16, 0
    %p106 = por %p104, %p105
    %s107 = ssub.s32 %s10, %s17
    %p108 = scmp.eq.s32.totalorder %s107, 0
    %s110 = sadd.s32 %s109, 1
    %s111 = scalar_select %p108, %s109, %s110
    %p114 = pneg %p108
    %p115 = scmp.eq.s32.totalorder %s10, 1
    %p116 = por %p114, %p115
    %p117 = scmp.ne.s32.totalorder %s109, %s112
    %p118 = scmp.eq.s32.totalorder %s10, 0
    %p119 = por %p117, %p118
    %p120 = scmp.ne.s32.totalorder %s109, %s112
    %p121 = scmp.eq.s32.totalorder %s15, 1
    %p122 = por %p120, %p121
    %p123 = scmp.ne.s32.totalorder %s112, %s113
    %p124 = scmp.eq.s32.totalorder %s15, 0
    %p125 = por %p123, %p124
    %p126 = scmp.ne.s32.totalorder %s112, %s113
    %p127 = scmp.eq.s32.totalorder %s16, 1
    %p128 = por %p126, %p127
    %p130 = scmp.ne.s32.totalorder %s113, %s129
    %p131 = scmp.eq.s32.totalorder %s16, 0
    %p132 = por %p130, %p131
    %p133 = scmp.le.s32.totalorder 1, %s10
    %p134 = scmp.lt.s32.totalorder %s10, 3
    %p135 = pnand %p133, %p134
    %p136 = pneg %p135
    // Predicated region
    $region9: #{tpu_custom_call.1} parent=5 // pred_check
      _
    $region10: #{tpu_custom_call.1} parent=5 // pred_check_branch
      %138 = sbr.rel (%p135) target = $region12
    $region11: #{tpu_custom_call.1} parent=5 // pred_region
      %s139 = ssub.s32 %s10, 1
      // Predicated region
      $region13: #{tpu_custom_call.1} parent=11 // pred_check
        %p140 = pneg %p57
      $region14: #{tpu_custom_call.1} parent=11 // pred_check_branch
        %142 = sbr.rel (%p140) target = $region16
      $region15: #{tpu_custom_call.1} parent=11 // pred_region
        _
      $region16: #{tpu_custom_call.1} parent=11 // pred_fallthru
        _
      // Predicated region
      $region17: #{tpu_custom_call.1} parent=11 // pred_check
        %p143 = pneg %p78
      $region18: #{tpu_custom_call.1} parent=11 // pred_check_branch
        %145 = sbr.rel (%p143) target = $region20
      $region19: #{tpu_custom_call.1} parent=11 // pred_region
        _
      $region20: #{tpu_custom_call.1} parent=11 // pred_fallthru
        _
      // Predicated region
      $region21: #{tpu_custom_call.1} parent=11 // pred_check
        %p146 = pneg %p99
      $region22: #{tpu_custom_call.1} parent=11 // pred_check_branch
        %148 = sbr.rel (%p146) target = $region24
      $region23: #{tpu_custom_call.1} parent=11 // pred_region
        _
      $region24: #{tpu_custom_call.1} parent=11 // pred_fallthru
        _
    $region12: #{tpu_custom_call.1} parent=5 // pred_fallthru
      _
    %p149 = scmp.lt.s32.totalorder %s10, 2
    // Predicated region
    $region25: #{tpu_custom_call.1} parent=5 // pred_check
      %p150 = pneg %p149
    $region26: #{tpu_custom_call.1} parent=5 // pred_check_branch
      %152 = sbr.rel (%p150) target = $region28
    $region27: #{tpu_custom_call.1} parent=5 // pred_region
      // Predicated region
      $region29: #{tpu_custom_call.1} parent=27 // pred_check
        %p153 = pneg %p30
      $region30: #{tpu_custom_call.1} parent=27 // pred_check_branch
        %155 = sbr.rel (%p153) target = $region32
      $region31: #{tpu_custom_call.1} parent=27 // pred_region
        %s156 = smul.u32 32, %s10
        %p157 = scmp.lt.s32.totalorder %s156, 63
        %s158 = scalar_select %p157, %s156, 63
        %s159 = smul.addr %s158, 4
        %s160 = scalar_lea.vmem %s0, %s159
        %s161 = smul.u32 32, %s10
      $region32: #{tpu_custom_call.1} parent=27 // pred_fallthru
        _
    $region28: #{tpu_custom_call.1} parent=5 // pred_fallthru
      _
    %p162 = scmp.le.s32.totalorder 1, %s10
    %p163 = scmp.lt.s32.totalorder %s10, 3
    %p164 = pnand %p162, %p163
    %p165 = pneg %p164
    // Predicated region
    $region33: #{tpu_custom_call.1} parent=5 // pred_check
      _
    $region34: #{tpu_custom_call.1} parent=5 // pred_check_branch
      %167 = sbr.rel (%p164) target = $region36
    $region35: #{tpu_custom_call.1} parent=5 // pred_region
      %s168 = ssub.s32 %s10, 1
      %s169 = smul.u32 32, %s15
      %p170 = scmp.lt.s32.totalorder %s169, 63
      %s171 = scalar_select %p170, %s169, 63
      %s172 = smul.addr %s171, 4
      %s173 = scalar_lea.vmem %s0, %s172
      %p174 = pneg %p36
      %p175 = pneg %p33
      %p176 = pneg %p57
      %p177 = pneg %p54
      %p178 = pneg %p78
      %p179 = pneg %p75
      %p180 = pneg %p99
      %p181 = pneg %p96
      %p182 = pneg %p125
      %p183 = pneg %p122
      %s184 = smul.u32 32, %s15
      %p185 = scmp.lt.s32.totalorder %s184, 63
      %s186 = scalar_select %p185, %s184, 63
      %s187 = smul.addr %s186, 4
      %s188 = scalar_lea.vmem %s4, %s187
      %s189 = smul.u32 32, %s15
      %p190 = scmp.lt.s32.totalorder %s189, 63
      %s191 = scalar_select %p190, %s189, 63
      %s192 = smul.addr %s191, 4
      %s193 = scalar_lea.vmem %s0, %s192
      %s194 = smul.u32 32, %s15
      %s195 = smul.u32 32, %s15
      %p196 = scmp.lt.s32.totalorder %s195, 63
      %s197 = scalar_select %p196, %s195, 63
      %s198 = smul.addr %s197, 4
      %s199 = scalar_lea.vmem %s4, %s198
      %s200 = smul.u32 32, %s15
      %v202 = vld [vmem:[%s193] sm:$0xf]
      %v203 = vld [vmem:[%s193 + $0x4] sm:$0xf]
      %v204 = vld [vmem:[%s193 + $0x8] sm:$0xf]
      %v205 = vld [vmem:[%s193 + $0xc] sm:$0xf]
      %v206 = vld [vmem:[%s193 + $0x10] sm:$0xf]
      %v207 = vld [vmem:[%s193 + $0x14] sm:$0xf]
      %v208 = vld [vmem:[%s193 + $0x18] sm:$0xf]
      %v209 = vld [vmem:[%s193 + $0x1c] sm:$0xf]
      %v210 = vld [vmem:[%s193 + $0x20] sm:$0xf]
      %v211 = vld [vmem:[%s193 + $0x24] sm:$0xf]
      %v212 = vld [vmem:[%s193 + $0x28] sm:$0xf]
      %v213 = vld [vmem:[%s193 + $0x2c] sm:$0xf]
      %v214 = vld [vmem:[%s193 + $0x30] sm:$0xf]
      %v215 = vld [vmem:[%s193 + $0x34] sm:$0xf]
      %v216 = vld [vmem:[%s193 + $0x38] sm:$0xf]
      %v217 = vld [vmem:[%s193 + $0x3c] sm:$0xf]
      %v218 = vld [vmem:[%s193 + $0x40] sm:$0xf]
      %v219 = vld [vmem:[%s193 + $0x44] sm:$0xf]
      %v220 = vld [vmem:[%s193 + $0x48] sm:$0xf]
      %v221 = vld [vmem:[%s193 + $0x4c] sm:$0xf]
      %v222 = vld [vmem:[%s193 + $0x50] sm:$0xf]
      %v223 = vld [vmem:[%s193 + $0x54] sm:$0xf]
      %v224 = vld [vmem:[%s193 + $0x58] sm:$0xf]
      %v225 = vld [vmem:[%s193 + $0x5c] sm:$0xf]
      %v226 = vld [vmem:[%s193 + $0x60] sm:$0xf]
      %v227 = vld [vmem:[%s193 + $0x64] sm:$0xf]
      %v228 = vld [vmem:[%s193 + $0x68] sm:$0xf]
      %v229 = vld [vmem:[%s193 + $0x6c] sm:$0xf]
      %v230 = vld [vmem:[%s193 + $0x70] sm:$0xf]
      %v231 = vld [vmem:[%s193 + $0x74] sm:$0xf]
      %v232 = vld [vmem:[%s193 + $0x78] sm:$0xf]
      %v233 = vld [vmem:[%s193 + $0x7c] sm:$0xf]
      %v234 = vld [vmem:[%s1] sm:$0xf]
      %v235 = vld [vmem:[%s1 + $0x4] sm:$0xf]
      %v236 = vld [vmem:[%s1 + $0x8] sm:$0xf]
      %v237 = vld [vmem:[%s1 + $0xc] sm:$0x3]
      %v270 = vunpack.c.l.b16 %v202
      %v271 = vunpack.c.l.b16 %v203
      %v272 = vunpack.c.l.b16 %v204
      %v273 = vunpack.c.l.b16 %v205
      %v274 = vunpack.c.l.b16 %v206
      %v275 = vunpack.c.l.b16 %v207
      %v276 = vunpack.c.l.b16 %v208
      %v277 = vunpack.c.l.b16 %v209
      %v278 = vunpack.c.l.b16 %v210
      %v279 = vunpack.c.l.b16 %v211
      %v280 = vunpack.c.l.b16 %v212
      %v281 = vunpack.c.l.b16 %v213
      %v282 = vunpack.c.l.b16 %v214
      %v283 = vunpack.c.l.b16 %v215
      %v284 = vunpack.c.l.b16 %v216
      %v285 = vunpack.c.l.b16 %v217
      %v286 = vunpack.c.l.b16 %v218
      %v287 = vunpack.c.l.b16 %v219
      %v288 = vunpack.c.l.b16 %v220
      %v289 = vunpack.c.l.b16 %v221
      %v290 = vunpack.c.l.b16 %v222
      %v291 = vunpack.c.l.b16 %v223
      %v292 = vunpack.c.l.b16 %v224
      %v293 = vunpack.c.l.b16 %v225
      %v294 = vunpack.c.l.b16 %v226
      %v295 = vunpack.c.l.b16 %v227
      %v296 = vunpack.c.l.b16 %v228
      %v297 = vunpack.c.l.b16 %v229
      %v298 = vunpack.c.l.b16 %v230
      %v299 = vunpack.c.l.b16 %v231
      %v300 = vunpack.c.l.b16 %v232
      %v301 = vunpack.c.l.b16 %v233
      %v302 = vpack.c.b16 %v271, %v270
      %v303 = vpack.c.b16 %v273, %v272
      %v304 = vpack.c.b16 %v275, %v274
      %v305 = vpack.c.b16 %v277, %v276
      %v306 = vpack.c.b16 %v279, %v278
      %v307 = vpack.c.b16 %v281, %v280
      %v308 = vpack.c.b16 %v283, %v282
      %v309 = vpack.c.b16 %v285, %v284
      %v310 = vpack.c.b16 %v287, %v286
      %v311 = vpack.c.b16 %v289, %v288
      %v312 = vpack.c.b16 %v291, %v290
      %v313 = vpack.c.b16 %v293, %v292
      %v314 = vpack.c.b16 %v295, %v294
      %v315 = vpack.c.b16 %v297, %v296
      %v316 = vpack.c.b16 %v299, %v298
      %v317 = vpack.c.b16 %v301, %v300
      %v322 = vunpack.c.l.b16 %v234
      %v323 = vunpack.c.l.b16 %v235
      %v324 = vunpack.c.l.b16 %v236
      %v325 = vunpack.c.l.b16 %v237
      %v326 = vpack.c.b16 %v323, %v322
      %v327 = vpack.c.b16 %v325, %v324
      %vm329 = vcmask 220160
      %v331 = vsel %vm329, %v302, 0
      %v334 = vsel %vm329, %v303, 0
      %v337 = vsel %vm329, %v304, 0
      %v340 = vsel %vm329, %v305, 0
      %v343 = vsel %vm329, %v306, 0
      %v346 = vsel %vm329, %v307, 0
      %v349 = vsel %vm329, %v308, 0
      %v352 = vsel %vm329, %v309, 0
      %v355 = vsel %vm329, %v310, 0
      %v358 = vsel %vm329, %v311, 0
      %v361 = vsel %vm329, %v312, 0
      %v364 = vsel %vm329, %v313, 0
      %v367 = vsel %vm329, %v314, 0
      %v370 = vsel %vm329, %v315, 0
      %v373 = vsel %vm329, %v316, 0
      %v376 = vsel %vm329, %v317, 0
      %vm378 = vcmask 1044480
      %vm379 = vcmask 1045504
      %v380 = vsel %vm378, 4294967295, 65535
      %v381 = vsel %vm379, %v380, 0
      %v383 = vand.u32 %v327, %v381
      %385 = vmatprep.subr.bf16.mxu0 0
      %386 = vmatpush1.bf16.msra.mxu0 %v326
      %387 = vmatprep.subr.bf16.mxu0 0
      %388 = vmatpush1.bf16.msra.mxu0 %v383
      %389 = vmatprep.subr.bf16.mxu0 0
      %390 = vmatpush1.bf16.msra.mxu0 0
      %391 = vmatprep.subr.bf16.mxu0 0
      %392 = vmatpush1.bf16.msra.mxu0 0
      %393 = vmatprep.subr.bf16.mxu0 0
      %394 = vmatpush1.bf16.msra.mxu0 0
      %395 = vmatprep.subr.bf16.mxu0 0
      %396 = vmatpush1.bf16.msra.mxu0 0
      %397 = vmatprep.subr.bf16.mxu0 0
      %398 = vmatpush1.bf16.msra.mxu0 0
      %399 = vmatprep.subr.bf16.mxu0 0
      %400 = vmatpush1.bf16.msra.mxu0 0
      %401 = vmatprep.subr.bf16.mxu0 0
      %402 = vmatpush1.bf16.msra.mxu0 0
      %403 = vmatprep.subr.bf16.mxu0 0
      %404 = vmatpush1.bf16.msra.mxu0 0
      %405 = vmatprep.subr.bf16.mxu0 0
      %406 = vmatpush1.bf16.msra.mxu0 0
      %407 = vmatprep.subr.bf16.mxu0 0
      %408 = vmatpush1.bf16.msra.mxu0 0
      %409 = vmatprep.subr.bf16.mxu0 0
      %410 = vmatpush1.bf16.msra.mxu0 0
      %411 = vmatprep.subr.bf16.mxu0 0
      %412 = vmatpush1.bf16.msra.mxu0 0
      %413 = vmatprep.subr.bf16.mxu0 0
      %414 = vmatpush1.bf16.msra.mxu0 0
      %415 = vmatprep.subr.bf16.mxu0 0
      %416 = vmatpush1.bf16.msra.mxu0 0
      %417 = vmatprep.mubr.bf16.mxu0 0
      %418 = vmatmul.mubr.bf16.gmra.mrb[0].mxu0 %v331
      %v419 = vpop.f32.mrb[0].mxu0
      %v420 = vadd.f32 0.0, %v419
      %v421 = vpop.f32.mrb[0].mxu0
      %v422 = vpop.f32.mrb[0].mxu0
      %v423 = vadd.f32 0.0, %v422
      %v424 = vpop.f32.mrb[0].mxu0
      %425 = vmatprep.mubr.bf16.mxu0 0
      %426 = vmatmul.mubr.bf16.gmra.mrb[0].mxu0 %v334
      %v427 = vpop.f32.mrb[0].mxu0
      %v428 = vadd.f32 0.0, %v427
      %v429 = vpop.f32.mrb[0].mxu0
      %v430 = vpop.f32.mrb[0].mxu0
      %v431 = vadd.f32 0.0, %v430
      %v432 = vpop.f32.mrb[0].mxu0
      %433 = vmatprep.mubr.bf16.mxu0 0
      %434 = vmatmul.mubr.bf16.gmra.mrb[0].mxu0 %v337
      %v435 = vpop.f32.mrb[0].mxu0
      %v436 = vadd.f32 0.0, %v435
      %v437 = vpop.f32.mrb[0].mxu0
      %v438 = vpop.f32.mrb[0].mxu0
      %v439 = vadd.f32 0.0, %v438
      %v440 = vpop.f32.mrb[0].mxu0
      %441 = vmatprep.mubr.bf16.mxu0 0
      %442 = vmatmul.mubr.bf16.gmra.mrb[0].mxu0 %v340
      %v443 = vpop.f32.mrb[0].mxu0
      %v444 = vadd.f32 0.0, %v443
      %v445 = vpop.f32.mrb[0].mxu0
      %v446 = vpop.f32.mrb[0].mxu0
      %v447 = vadd.f32 0.0, %v446
      %v448 = vpop.f32.mrb[0].mxu0
      %449 = vmatprep.mubr.bf16.mxu0 0
      %450 = vmatmul.mubr.bf16.gmra.mrb[0].mxu0 %v343
      %v451 = vpop.f32.mrb[0].mxu0
      %v452 = vadd.f32 0.0, %v451
      %v453 = vpop.f32.mrb[0].mxu0
      %v454 = vpop.f32.mrb[0].mxu0
      %v455 = vadd.f32 0.0, %v454
      %v456 = vpop.f32.mrb[0].mxu0
      %457 = vmatprep.mubr.bf16.mxu0 0
      %458 = vmatmul.mubr.bf16.gmra.mrb[0].mxu0 %v346
      %v459 = vpop.f32.mrb[0].mxu0
      %v460 = vadd.f32 0.0, %v459
      %v461 = vpop.f32.mrb[0].mxu0
      %v462 = vpop.f32.mrb[0].mxu0
      %v463 = vadd.f32 0.0, %v462
      %v464 = vpop.f32.mrb[0].mxu0
      %465 = vmatprep.mubr.bf16.mxu0 0
      %466 = vmatmul.mubr.bf16.gmra.mrb[0].mxu0 %v349
      %v467 = vpop.f32.mrb[0].mxu0
      %v468 = vadd.f32 0.0, %v467
      %v469 = vpop.f32.mrb[0].mxu0
      %v470 = vpop.f32.mrb[0].mxu0
      %v471 = vadd.f32 0.0, %v470
      %v472 = vpop.f32.mrb[0].mxu0
      %473 = vmatprep.mubr.bf16.mxu0 0
      %474 = vmatmul.mubr.bf16.gmra.mrb[0].mxu0 %v352
      %v475 = vpop.f32.mrb[0].mxu0
      %v476 = vadd.f32 0.0, %v475
      %v477 = vpop.f32.mrb[0].mxu0
      %v478 = vpop.f32.mrb[0].mxu0
      %v479 = vadd.f32 0.0, %v478
      %v480 = vpop.f32.mrb[0].mxu0
      %481 = vmatprep.mubr.bf16.mxu0 0
      %482 = vmatmul.mubr.bf16.gmra.mrb[0].mxu0 %v355
      %v483 = vpop.f32.mrb[0].mxu0
      %v484 = vadd.f32 0.0, %v483
      %v485 = vpop.f32.mrb[0].mxu0
      %v486 = vpop.f32.mrb[0].mxu0
      %v487 = vadd.f32 0.0, %v486
      %v488 = vpop.f32.mrb[0].mxu0
      %489 = vmatprep.mubr.bf16.mxu0 0
      %490 = vmatmul.mubr.bf16.gmra.mrb[0].mxu0 %v358
      %v491 = vpop.f32.mrb[0].mxu0
      %v492 = vadd.f32 0.0, %v491
      %v493 = vpop.f32.mrb[0].mxu0
      %v494 = vpop.f32.mrb[0].mxu0
      %v495 = vadd.f32 0.0, %v494
      %v496 = vpop.f32.mrb[0].mxu0
      %497 = vmatprep.mubr.bf16.mxu0 0
      %498 = vmatmul.mubr.bf16.gmra.mrb[0].mxu0 %v361
      %v499 = vpop.f32.mrb[0].mxu0
      %v500 = vadd.f32 0.0, %v499
      %v501 = vpop.f32.mrb[0].mxu0
      %v502 = vpop.f32.mrb[0].mxu0
      %v503 = vadd.f32 0.0, %v502
      %v504 = vpop.f32.mrb[0].mxu0
      %505 = vmatprep.mubr.bf16.mxu0 0
      %506 = vmatmul.mubr.bf16.gmra.mrb[0].mxu0 %v364
      %v507 = vpop.f32.mrb[0].mxu0
      %v508 = vadd.f32 0.0, %v507
      %v509 = vpop.f32.mrb[0].mxu0
      %v510 = vpop.f32.mrb[0].mxu0
      %v511 = vadd.f32 0.0, %v510
      %v512 = vpop.f32.mrb[0].mxu0
      %513 = vmatprep.mubr.bf16.mxu0 0
      %514 = vmatmul.mubr.bf16.gmra.mrb[0].mxu0 %v367
      %v515 = vpop.f32.mrb[0].mxu0
      %v516 = vadd.f32 0.0, %v515
      %v517 = vpop.f32.mrb[0].mxu0
      %v518 = vpop.f32.mrb[0].mxu0
      %v519 = vadd.f32 0.0, %v518
      %v520 = vpop.f32.mrb[0].mxu0
      %521 = vmatprep.mubr.bf16.mxu0 0
      %522 = vmatmul.mubr.bf16.gmra.mrb[0].mxu0 %v370
      %v523 = vpop.f32.mrb[0].mxu0
      %v524 = vadd.f32 0.0, %v523
      %v525 = vpop.f32.mrb[0].mxu0
      %v526 = vpop.f32.mrb[0].mxu0
      %v527 = vadd.f32 0.0, %v526
      %v528 = vpop.f32.mrb[0].mxu0
      %529 = vmatprep.mubr.bf16.mxu0 0
      %530 = vmatmul.mubr.bf16.gmra.mrb[0].mxu0 %v373
      %v531 = vpop.f32.mrb[0].mxu0
      %v532 = vadd.f32 0.0, %v531
      %v533 = vpop.f32.mrb[0].mxu0
      %v534 = vpop.f32.mrb[0].mxu0
      %v535 = vadd.f32 0.0, %v534
      %v536 = vpop.f32.mrb[0].mxu0
      %537 = vmatprep.mubr.bf16.mxu0 0
      %538 = vmatmul.mubr.bf16.gmra.mrb[0].mxu0 %v376
      %v539 = vpop.f32.mrb[0].mxu0
      %v540 = vadd.f32 0.0, %v539
      %v541 = vpop.f32.mrb[0].mxu0
      %v542 = vpop.f32.mrb[0].mxu0
      %v543 = vadd.f32 0.0, %v542
      %v544 = vpop.f32.mrb[0].mxu0
      %545 = vdwg.mxu0
      %v546 = vld [vmem:[%s2] sm:$0x1]
      %v548 = vlaneseq
      %v549 = vshrl.u32 %v548, 7
      %v550 = vsub.s32 0, %v549
      %v551 = vrot.slane %v546, %v550
      %v553 = vmul.f32 %v420, %v551
      %v554 = vmul.f32 %v423, %v551
      %v555 = vmul.f32 %v428, %v551
      %v556 = vmul.f32 %v431, %v551
      %v557 = vmul.f32 %v436, %v551
      %v558 = vmul.f32 %v439, %v551
      %v559 = vmul.f32 %v444, %v551
      %v560 = vmul.f32 %v447, %v551
      %v561 = vmul.f32 %v452, %v551
      %v562 = vmul.f32 %v455, %v551
      %v563 = vmul.f32 %v460, %v551
      %v564 = vmul.f32 %v463, %v551
      %v565 = vmul.f32 %v468, %v551
      %v566 = vmul.f32 %v471, %v551
      %v567 = vmul.f32 %v476, %v551
      %v568 = vmul.f32 %v479, %v551
      %v569 = vmul.f32 %v484, %v551
      %v570 = vmul.f32 %v487, %v551
      %v571 = vmul.f32 %v492, %v551
      %v572 = vmul.f32 %v495, %v551
      %v573 = vmul.f32 %v500, %v551
      %v574 = vmul.f32 %v503, %v551
      %v575 = vmul.f32 %v508, %v551
      %v576 = vmul.f32 %v511, %v551
      %v577 = vmul.f32 %v516, %v551
      %v578 = vmul.f32 %v519, %v551
      %v579 = vmul.f32 %v524, %v551
      %v580 = vmul.f32 %v527, %v551
      %v581 = vmul.f32 %v532, %v551
      %v582 = vmul.f32 %v535, %v551
      %v583 = vmul.f32 %v540, %v551
      %v584 = vmul.f32 %v543, %v551
      %v585 = vld [vmem:[%s3] sm:$0x1]
      %v587 = vlaneseq
      %v588 = vshrl.u32 %v587, 7
      %v589 = vsub.s32 0, %v588
      %v590 = vrot.slane %v585, %v589
      %v592 = vadd.f32 %v553, %v590
      %v593 = vadd.f32 %v554, %v590
      %v594 = vadd.f32 %v555, %v590
      %v595 = vadd.f32 %v556, %v590
      %v596 = vadd.f32 %v557, %v590
      %v597 = vadd.f32 %v558, %v590
      %v598 = vadd.f32 %v559, %v590
      %v599 = vadd.f32 %v560, %v590
      %v600 = vadd.f32 %v561, %v590
      %v601 = vadd.f32 %v562, %v590
      %v602 = vadd.f32 %v563, %v590
      %v603 = vadd.f32 %v564, %v590
      %v604 = vadd.f32 %v565, %v590
      %v605 = vadd.f32 %v566, %v590
      %v606 = vadd.f32 %v567, %v590
      %v607 = vadd.f32 %v568, %v590
      %v608 = vadd.f32 %v569, %v590
      %v609 = vadd.f32 %v570, %v590
      %v610 = vadd.f32 %v571, %v590
      %v611 = vadd.f32 %v572, %v590
      %v612 = vadd.f32 %v573, %v590
      %v613 = vadd.f32 %v574, %v590
      %v614 = vadd.f32 %v575, %v590
      %v615 = vadd.f32 %v576, %v590
      %v616 = vadd.f32 %v577, %v590
      %v617 = vadd.f32 %v578, %v590
      %v618 = vadd.f32 %v579, %v590
      %v619 = vadd.f32 %v580, %v590
      %v620 = vadd.f32 %v581, %v590
      %v621 = vadd.f32 %v582, %v590
      %v622 = vadd.f32 %v583, %v590
      %v623 = vadd.f32 %v584, %v590
      %v624 = vmax.f32 %v592, 0.0
      %v625 = vmax.f32 %v593, 0.0
      %v626 = vmax.f32 %v594, 0.0
      %v627 = vmax.f32 %v595, 0.0
      %v628 = vmax.f32 %v596, 0.0
      %v629 = vmax.f32 %v597, 0.0
      %v630 = vmax.f32 %v598, 0.0
      %v631 = vmax.f32 %v599, 0.0
      %v632 = vmax.f32 %v600, 0.0
      %v633 = vmax.f32 %v601, 0.0
      %v634 = vmax.f32 %v602, 0.0
      %v635 = vmax.f32 %v603, 0.0
      %v636 = vmax.f32 %v604, 0.0
      %v637 = vmax.f32 %v605, 0.0
      %v638 = vmax.f32 %v606, 0.0
      %v639 = vmax.f32 %v607, 0.0
      %v640 = vmax.f32 %v608, 0.0
      %v641 = vmax.f32 %v609, 0.0
      %v642 = vmax.f32 %v610, 0.0
      %v643 = vmax.f32 %v611, 0.0
      %v644 = vmax.f32 %v612, 0.0
      %v645 = vmax.f32 %v613, 0.0
      %v646 = vmax.f32 %v614, 0.0
      %v647 = vmax.f32 %v615, 0.0
      %v648 = vmax.f32 %v616, 0.0
      %v649 = vmax.f32 %v617, 0.0
      %v650 = vmax.f32 %v618, 0.0
      %v651 = vmax.f32 %v619, 0.0
      %v652 = vmax.f32 %v620, 0.0
      %v653 = vmax.f32 %v621, 0.0
      %v654 = vmax.f32 %v622, 0.0
      %v655 = vmax.f32 %v623, 0.0
      %v656 = vpack.c.bf16 %v625, %v624
      %v657 = vpack.c.bf16 %v627, %v626
      %v658 = vpack.c.bf16 %v629, %v628
      %v659 = vpack.c.bf16 %v631, %v630
      %v660 = vpack.c.bf16 %v633, %v632
      %v661 = vpack.c.bf16 %v635, %v634
      %v662 = vpack.c.bf16 %v637, %v636
      %v663 = vpack.c.bf16 %v639, %v638
      %v664 = vpack.c.bf16 %v641, %v640
      %v665 = vpack.c.bf16 %v643, %v642
      %v666 = vpack.c.bf16 %v645, %v644
      %v667 = vpack.c.bf16 %v647, %v646
      %v668 = vpack.c.bf16 %v649, %v648
      %v669 = vpack.c.bf16 %v651, %v650
      %v670 = vpack.c.bf16 %v653, %v652
      %v671 = vpack.c.bf16 %v655, %v654
      %v688 = vunpack.c.l.b16 %v656
      %v689 = vunpack.c.h.b16 %v656
      %v690 = vunpack.c.l.b16 %v657
      %v691 = vunpack.c.h.b16 %v657
      %v692 = vunpack.c.l.b16 %v658
      %v693 = vunpack.c.h.b16 %v658
      %v694 = vunpack.c.l.b16 %v659
      %v695 = vunpack.c.h.b16 %v659
      %v696 = vunpack.c.l.b16 %v660
      %v697 = vunpack.c.h.b16 %v660
      %v698 = vunpack.c.l.b16 %v661
      %v699 = vunpack.c.h.b16 %v661
      %v700 = vunpack.c.l.b16 %v662
      %v701 = vunpack.c.h.b16 %v662
      %v702 = vunpack.c.l.b16 %v663
      %v703 = vunpack.c.h.b16 %v663
      %v704 = vunpack.c.l.b16 %v664
      %v705 = vunpack.c.h.b16 %v664
      %v706 = vunpack.c.l.b16 %v665
      %v707 = vunpack.c.h.b16 %v665
      %v708 = vunpack.c.l.b16 %v666
      %v709 = vunpack.c.h.b16 %v666
      %v710 = vunpack.c.l.b16 %v667
      %v711 = vunpack.c.h.b16 %v667
      %v712 = vunpack.c.l.b16 %v668
      %v713 = vunpack.c.h.b16 %v668
      %v714 = vunpack.c.l.b16 %v669
      %v715 = vunpack.c.h.b16 %v669
      %v716 = vunpack.c.l.b16 %v670
      %v717 = vunpack.c.h.b16 %v670
      %v718 = vunpack.c.l.b16 %v671
      %v719 = vunpack.c.h.b16 %v671
      %v720 = vpack.c.b16 %v688, %v688
      %v721 = vpack.c.b16 %v689, %v689
      %v722 = vpack.c.b16 %v690, %v690
      %v723 = vpack.c.b16 %v691, %v691
      %v724 = vpack.c.b16 %v692, %v692
      %v725 = vpack.c.b16 %v693, %v693
      %v726 = vpack.c.b16 %v694, %v694
      %v727 = vpack.c.b16 %v695, %v695
      %v728 = vpack.c.b16 %v696, %v696
      %v729 = vpack.c.b16 %v697, %v697
      %v730 = vpack.c.b16 %v698, %v698
      %v731 = vpack.c.b16 %v699, %v699
      %v732 = vpack.c.b16 %v700, %v700
      %v733 = vpack.c.b16 %v701, %v701
      %v734 = vpack.c.b16 %v702, %v702
      %v735 = vpack.c.b16 %v703, %v703
      %v736 = vpack.c.b16 %v704, %v704
      %v737 = vpack.c.b16 %v705, %v705
      %v738 = vpack.c.b16 %v706, %v706
      %v739 = vpack.c.b16 %v707, %v707
      %v740 = vpack.c.b16 %v708, %v708
      %v741 = vpack.c.b16 %v709, %v709
      %v742 = vpack.c.b16 %v710, %v710
      %v743 = vpack.c.b16 %v711, %v711
      %v744 = vpack.c.b16 %v712, %v712
      %v745 = vpack.c.b16 %v713, %v713
      %v746 = vpack.c.b16 %v714, %v714
      %v747 = vpack.c.b16 %v715, %v715
      %v748 = vpack.c.b16 %v716, %v716
      %v749 = vpack.c.b16 %v717, %v717
      %v750 = vpack.c.b16 %v718, %v718
      %v751 = vpack.c.b16 %v719, %v719
      %vm784 = vcmask 519168
      %785 = vst.msk [vmem:[%s199] sm:$0xf] %vm784, %v720
      %786 = vst.msk [vmem:[%s199 + $0x4] sm:$0xf] %vm784, %v721
      %787 = vst.msk [vmem:[%s199 + $0x8] sm:$0xf] %vm784, %v722
      %788 = vst.msk [vmem:[%s199 + $0xc] sm:$0xf] %vm784, %v723
      %789 = vst.msk [vmem:[%s199 + $0x10] sm:$0xf] %vm784, %v724
      %790 = vst.msk [vmem:[%s199 + $0x14] sm:$0xf] %vm784, %v725
      %791 = vst.msk [vmem:[%s199 + $0x18] sm:$0xf] %vm784, %v726
      %792 = vst.msk [vmem:[%s199 + $0x1c] sm:$0xf] %vm784, %v727
      %793 = vst.msk [vmem:[%s199 + $0x20] sm:$0xf] %vm784, %v728
      %794 = vst.msk [vmem:[%s199 + $0x24] sm:$0xf] %vm784, %v729
      %795 = vst.msk [vmem:[%s199 + $0x28] sm:$0xf] %vm784, %v730
      %796 = vst.msk [vmem:[%s199 + $0x2c] sm:$0xf] %vm784, %v731
      %797 = vst.msk [vmem:[%s199 + $0x30] sm:$0xf] %vm784, %v732
      %798 = vst.msk [vmem:[%s199 + $0x34] sm:$0xf] %vm784, %v733
      %799 = vst.msk [vmem:[%s199 + $0x38] sm:$0xf] %vm784, %v734
      %800 = vst.msk [vmem:[%s199 + $0x3c] sm:$0xf] %vm784, %v735
      %801 = vst.msk [vmem:[%s199 + $0x40] sm:$0xf] %vm784, %v736
      %802 = vst.msk [vmem:[%s199 + $0x44] sm:$0xf] %vm784, %v737
      %803 = vst.msk [vmem:[%s199 + $0x48] sm:$0xf] %vm784, %v738
      %804 = vst.msk [vmem:[%s199 + $0x4c] sm:$0xf] %vm784, %v739
      %805 = vst.msk [vmem:[%s199 + $0x50] sm:$0xf] %vm784, %v740
      %806 = vst.msk [vmem:[%s199 + $0x54] sm:$0xf] %vm784, %v741
      %807 = vst.msk [vmem:[%s199 + $0x58] sm:$0xf] %vm784, %v742
      %808 = vst.msk [vmem:[%s199 + $0x5c] sm:$0xf] %vm784, %v743
      %809 = vst.msk [vmem:[%s199 + $0x60] sm:$0xf] %vm784, %v744
      %810 = vst.msk [vmem:[%s199 + $0x64] sm:$0xf] %vm784, %v745
      %811 = vst.msk [vmem:[%s199 + $0x68] sm:$0xf] %vm784, %v746
      %812 = vst.msk [vmem:[%s199 + $0x6c] sm:$0xf] %vm784, %v747
      %813 = vst.msk [vmem:[%s199 + $0x70] sm:$0xf] %vm784, %v748
      %814 = vst.msk [vmem:[%s199 + $0x74] sm:$0xf] %vm784, %v749
      %815 = vst.msk [vmem:[%s199 + $0x78] sm:$0xf] %vm784, %v750
      %816 = vst.msk [vmem:[%s199 + $0x7c] sm:$0xf] %vm784, %v751
      %s817 = smul.u32 32, %s15
      %p818 = scmp.lt.s32.totalorder %s817, 63
      %s819 = scalar_select %p818, %s817, 63
      %s820 = smul.addr %s819, 4
      %s821 = scalar_lea.vmem %s4, %s820
      // Predicated region
      $region37: #{tpu_custom_call.1} parent=35 // pred_check
        %p822 = pneg %p122
      $region38: #{tpu_custom_call.1} parent=35 // pred_check_branch
        %824 = sbr.rel (%p822) target = $region40
      $region39: #{tpu_custom_call.1} parent=35 // pred_region
        %s825 = smul.u32 32, %s15
      $region40: #{tpu_custom_call.1} parent=35 // pred_fallthru
        _
    $region36: #{tpu_custom_call.1} parent=5 // pred_fallthru
      _
    %p826 = scmp.le.s32.totalorder 2, %s10
    // Predicated region
    $region41: #{tpu_custom_call.1} parent=5 // pred_check
      %p827 = pneg %p826
    $region42: #{tpu_custom_call.1} parent=5 // pred_check_branch
      %829 = sbr.rel (%p827) target = $region44
    $region43: #{tpu_custom_call.1} parent=5 // pred_region
      %s830 = ssub.s32 %s10, 2
      // Predicated region
      $region45: #{tpu_custom_call.1} parent=43 // pred_check
        %p831 = pneg %p128
      $region46: #{tpu_custom_call.1} parent=43 // pred_check_branch
        %833 = sbr.rel (%p831) target = $region48
      $region47: #{tpu_custom_call.1} parent=43 // pred_region
        %s834 = smul.u32 32, %s16
        %p835 = scmp.lt.s32.totalorder %s834, 63
        %s836 = scalar_select %p835, %s834, 63
        %s837 = smul.addr %s836, 4
        %s838 = scalar_lea.vmem %s4, %s837
      $region48: #{tpu_custom_call.1} parent=43 // pred_fallthru
        _
    $region44: #{tpu_custom_call.1} parent=5 // pred_fallthru
      _
  $region6: #{tpu_custom_call.1} parent=0 // loop_footer
    %s14 = sadd.s32 1, %s10
  $region7: #{tpu_custom_call.1} parent=0 // loop_footer_branch
    %9 = sbr.rel target = $region3
  $region8: #{tpu_custom_call.1} parent=0 // loop_exit
    _

</llo_original>
